<compile_context>
chip_gen: v6e
topology: v6e:2x2x1
jax: 0.10.0
libtpu: 0.0.40
codegen_flags: <defaults>
</compile_context>

<pallas_src>
import functools

import jax
import jax.numpy as jnp
from jax.experimental import pallas as pl
from jax.experimental.pallas import tpu as pltpu


def _round_up(x, m):
    return ((x + m - 1) // m) * m


def mlp_decoder_kernel(x_ref,
                       w1_ref, b1_ref,
                       w2_ref, b2_ref,
                       w3_ref, b3_ref,
                       w4_ref, b4_ref,
                       o_ref):
    """Fused MLP forward for one batch tile: 3x (Linear + ReLU) + final Linear.

    x arrives as f32 and is cast to bf16 in-kernel; weights are bf16; matmul
    accumulation, bias add and ReLU happen in f32.
    """
    x = x_ref[...].astype(jnp.bfloat16)

    # Layer 1: Linear(emb_dim -> 64) + ReLU
    h = jnp.dot(x, w1_ref[...], preferred_element_type=jnp.float32) + b1_ref[...]
    h = jnp.maximum(h, 0.0)

    # Layer 2: Linear(64 -> 64) + ReLU
    h = jnp.dot(h.astype(jnp.bfloat16), w2_ref[...],
                preferred_element_type=jnp.float32) + b2_ref[...]
    h = jnp.maximum(h, 0.0)

    # Layer 3: Linear(64 -> 64) + ReLU
    h = jnp.dot(h.astype(jnp.bfloat16), w3_ref[...],
                preferred_element_type=jnp.float32) + b3_ref[...]
    h = jnp.maximum(h, 0.0)

    # Output layer: Linear(64 -> dim), no activation; store only real columns.
    out = jnp.dot(h.astype(jnp.bfloat16), w4_ref[...],
                  preferred_element_type=jnp.float32) + b4_ref[...]
    o_ref[...] = out.astype(o_ref.dtype)


def prepare_params(params):
    """One-time conversion to kernel-ready layout: bf16 weights, f32 (1,out) biases.

    Hoists the per-call dtype casts off the pallas_call launch path.
    """
    return [(w.astype(jnp.bfloat16), b.astype(jnp.float32)) for w, b in params]


def _choose_tile(B, tm):
    """Pick the batch tile size.

    * multiple of 16 (bf16 sublane packing) when the batch is tiled,
    * >= 2 grid steps for large batches so v7x megacore can shard,
    * exactly B when a single tile covers the whole batch (block dim equals the
      full array dim, so no padding and no ragged tile).
    """
    TM = min(_round_up(tm, 16), _round_up(B, 16))
    if B >= 32 and -(-B // TM) < 2:          # force >= 2 steps when splittable
        TM = _round_up(-(-B // 2), 16)
    if TM >= B:
        TM = B
    return TM


@functools.partial(jax.jit, static_argnames=("tm", "out_dtype"))
def decoder_forward(x, params, *, tm=4096, out_dtype=jnp.float32):
    """x: (B, emb_dim) float32. params: prepared [(W (in,out) bf16, b (1,out) f32)].

    Set out_dtype=jnp.bfloat16 if downstream tolerates it (halves the output
    HBM stream); default f32 matches the PyTorch module.
    """
    B, emb_dim = x.shape
    (w1, b1), (w2, b2), (w3, b3), (w4, b4) = params
    h1, h2, h3 = w1.shape[1], w2.shape[1], w3.shape[1]
    out_dim = w4.shape[1]

    TM = _choose_tile(B, tm)
    grid = (pl.cdiv(B, TM),)   # ragged tail (if any) handled by edge-block masking

    def resident(shape):
        # Same block index every grid step -> stays VMEM-resident across the loop.
        return pl.BlockSpec(shape, lambda i: tuple(0 for _ in shape))

    flops = 2 * B * (emb_dim * h1 + h1 * h2 + h2 * h3 + h3 * out_dim)
    bytes_accessed = (
        x.size * x.dtype.itemsize
        + B * out_dim * jnp.dtype(out_dtype).itemsize
        + sum(w.size * w.dtype.itemsize + b.size * b.dtype.itemsize
              for w, b in params)
    )

    return pl.pallas_call(
        mlp_decoder_kernel,
        out_shape=jax.ShapeDtypeStruct((B, out_dim), out_dtype),
        grid=grid,
        in_specs=[
            pl.BlockSpec((TM, emb_dim), lambda i: (i, 0)),   # streamed x tile
            resident(w1.shape), resident(b1.shape),
            resident(w2.shape), resident(b2.shape),
            resident(w3.shape), resident(b3.shape),
            resident(w4.shape), resident(b4.shape),
        ],
        out_specs=pl.BlockSpec((TM, out_dim), lambda i: (i, 0)),
        compiler_params=pltpu.CompilerParams(
            dimension_semantics=("parallel",),        # megacore sharding on v7x
            vmem_limit_bytes=32 * 1024 * 1024,        # safe on 64 MiB v7x VMEM
        ),
        cost_estimate=pl.CostEstimate(
            flops=flops, transcendentals=0, bytes_accessed=bytes_accessed),
    )(x, w1, b1, w2, b2, w3, b3, w4, b4)


def init_params(key, emb_dim, dim, layer_widths=(64, 64, 64)):
    """Parameter init mirroring the PyTorch module's shapes (weights stored
    pre-transposed as (in, out); biases as (1, out))."""
    dims = [emb_dim] + list(layer_widths) + [dim]
    params = []
    for i in range(len(dims) - 1):
        in_d, out_d = dims[i], dims[i + 1]
        key, kw, kb = jax.random.split(key, 3)
        bound = 1.0 / jnp.sqrt(in_d)
        w = jax.random.uniform(kw, (in_d, out_d), jnp.float32, -bound, bound)
        b = jax.random.uniform(kb, (1, out_d), jnp.float32, -bound, bound)
        params.append((w, b))
    return params


def reference_forward(x, params):
    """Plain-JAX reference matching the kernel's dtype strategy
    (bf16 matmul inputs, f32 accumulation / bias / ReLU)."""
    h = x.astype(jnp.bfloat16)
    n = len(params)
    for i, (w, b) in enumerate(params):
        h = jnp.dot(h, w.astype(jnp.bfloat16),
                    preferred_element_type=jnp.float32) + b
        if i < n - 1:
            h = jnp.maximum(h, 0.0).astype(jnp.bfloat16)
    return h


def reference_forward_f32(x, params):
    """Full-f32 reference of the original PyTorch semantics (loose check)."""
    h = x
    for i, (w, b) in enumerate(params):
        h = h @ w + b
        if i < len(params) - 1:
            h = jnp.maximum(h, 0.0)
    return h


if __name__ == "__main__":
    # Decoder(dim=16, emb_dim=32): maps (B, 32) -> (B, 16)
    B, emb_dim, dim = 8, 32, 16

    key = jax.random.PRNGKey(0)
    key, kx = jax.random.split(key)
    x = jax.random.normal(kx, (B, emb_dim), dtype=jnp.float32)

    raw_params = init_params(key, emb_dim, dim, layer_widths=(64, 64, 64))
    params = prepare_params(raw_params)   # one-time kernel-ready layout

    out = decoder_forward(x, params)
    out = jax.block_until_ready(out)
    assert out.shape == (B, dim)
    assert out.dtype == jnp.float32

    # Exact-strategy reference (bf16 matmul inputs, f32 accumulate).
    ref_bf16 = reference_forward(x, raw_params)
    assert jnp.allclose(out, ref_bf16, atol=1e-2, rtol=1e-2)

    # Loose check against the pure-f32 PyTorch-equivalent forward.
    # TODO(synk): bf16 MXU inputs deviate ~1e-2 from the PyTorch f32 forward;
    # use an all-f32 variant if this decoder feeds a loss/gradient.
    ref_f32 = reference_forward_f32(x, raw_params)
    assert jnp.allclose(out, ref_f32, atol=5e-2, rtol=5e-2)

    print("KERNEL_OK")
</pallas_src>

<mosaic_0001>
module attributes {stable_mosaic.version = 11 : i64} {
  func.func @mlp_decoder_kernel(%arg0: i32, %arg1: memref<8x32xf32, #tpu.memory_space<vmem>>, %arg2: memref<32x64xbf16, #tpu.memory_space<vmem>>, %arg3: memref<1x64xf32, #tpu.memory_space<vmem>>, %arg4: memref<64x64xbf16, #tpu.memory_space<vmem>>, %arg5: memref<1x64xf32, #tpu.memory_space<vmem>>, %arg6: memref<64x64xbf16, #tpu.memory_space<vmem>>, %arg7: memref<1x64xf32, #tpu.memory_space<vmem>>, %arg8: memref<64x16xbf16, #tpu.memory_space<vmem>>, %arg9: memref<1x16xf32, #tpu.memory_space<vmem>>, %arg10: memref<8x16xf32, #tpu.memory_space<vmem>>) attributes {dimension_semantics = [#tpu.dimension_semantics<parallel>], iteration_bounds = array<i64: 1>, scalar_prefetch = 0 : i64, scratch_operands = 0 : i64, tpu.core_type = #tpu.core_type<tc>, window_params = [{transform_indices = @transform_0, window_bounds = array<i64: 8, 32>}, {pipeline_mode = #tpu.pipeline_mode<synchronous>, transform_indices = @transform_1, window_bounds = array<i64: 32, 64>}, {pipeline_mode = #tpu.pipeline_mode<synchronous>, transform_indices = @transform_2, window_bounds = array<i64: 1, 64>}, {pipeline_mode = #tpu.pipeline_mode<synchronous>, transform_indices = @transform_3, window_bounds = array<i64: 64, 64>}, {pipeline_mode = #tpu.pipeline_mode<synchronous>, transform_indices = @transform_4, window_bounds = array<i64: 1, 64>}, {pipeline_mode = #tpu.pipeline_mode<synchronous>, transform_indices = @transform_5, window_bounds = array<i64: 64, 64>}, {pipeline_mode = #tpu.pipeline_mode<synchronous>, transform_indices = @transform_6, window_bounds = array<i64: 1, 64>}, {pipeline_mode = #tpu.pipeline_mode<synchronous>, transform_indices = @transform_7, window_bounds = array<i64: 64, 16>}, {pipeline_mode = #tpu.pipeline_mode<synchronous>, transform_indices = @transform_8, window_bounds = array<i64: 1, 16>}, {transform_indices = @transform_9, window_bounds = array<i64: 8, 16>}]} {
    %c0 = arith.constant 0 : index
    %c0_0 = arith.constant 0 : index
    %0 = vector.load %arg1[%c0, %c0_0] : memref<8x32xf32, #tpu.memory_space<vmem>>, vector<8x32xf32>
    %1 = arith.truncf %0 : vector<8x32xf32> to vector<8x32xbf16>
    %c0_1 = arith.constant 0 : index
    %c0_2 = arith.constant 0 : index
    %2 = vector.load %arg2[%c0_1, %c0_2] : memref<32x64xbf16, #tpu.memory_space<vmem>>, vector<32x64xbf16>
    %cst = arith.constant dense<0.000000e+00> : vector<8x64xf32>
    %3 = tpu.matmul %1, %2, %cst {dimension_numbers = #tpu.dot_dimension_numbers<[1], [0], [0], [1], [0, 0, 1, 1], [], []>} : vector<8x32xbf16>, vector<32x64xbf16>, vector<8x64xf32> -> vector<8x64xf32>
    %c0_3 = arith.constant 0 : index
    %c0_4 = arith.constant 0 : index
    %4 = vector.load %arg3[%c0_3, %c0_4] : memref<1x64xf32, #tpu.memory_space<vmem>>, vector<1x64xf32>
    %5 = vector.broadcast %4 : vector<1x64xf32> to vector<8x64xf32>
    %6 = arith.addf %3, %5 : vector<8x64xf32>
    %cst_5 = arith.constant 0.000000e+00 : f32
    %7 = vector.broadcast %cst_5 : f32 to vector<8x64xf32>
    %8 = arith.maximumf %6, %7 : vector<8x64xf32>
    %9 = arith.truncf %8 : vector<8x64xf32> to vector<8x64xbf16>
    %c0_6 = arith.constant 0 : index
    %c0_7 = arith.constant 0 : index
    %10 = vector.load %arg4[%c0_6, %c0_7] : memref<64x64xbf16, #tpu.memory_space<vmem>>, vector<64x64xbf16>
    %cst_8 = arith.constant dense<0.000000e+00> : vector<8x64xf32>
    %11 = tpu.matmul %9, %10, %cst_8 {dimension_numbers = #tpu.dot_dimension_numbers<[1], [0], [0], [1], [0, 0, 1, 1], [], []>} : vector<8x64xbf16>, vector<64x64xbf16>, vector<8x64xf32> -> vector<8x64xf32>
    %c0_9 = arith.constant 0 : index
    %c0_10 = arith.constant 0 : index
    %12 = vector.load %arg5[%c0_9, %c0_10] : memref<1x64xf32, #tpu.memory_space<vmem>>, vector<1x64xf32>
    %13 = vector.broadcast %12 : vector<1x64xf32> to vector<8x64xf32>
    %14 = arith.addf %11, %13 : vector<8x64xf32>
    %cst_11 = arith.constant 0.000000e+00 : f32
    %15 = vector.broadcast %cst_11 : f32 to vector<8x64xf32>
    %16 = arith.maximumf %14, %15 : vector<8x64xf32>
    %17 = arith.truncf %16 : vector<8x64xf32> to vector<8x64xbf16>
    %c0_12 = arith.constant 0 : index
    %c0_13 = arith.constant 0 : index
    %18 = vector.load %arg6[%c0_12, %c0_13] : memref<64x64xbf16, #tpu.memory_space<vmem>>, vector<64x64xbf16>
    %cst_14 = arith.constant dense<0.000000e+00> : vector<8x64xf32>
    %19 = tpu.matmul %17, %18, %cst_14 {dimension_numbers = #tpu.dot_dimension_numbers<[1], [0], [0], [1], [0, 0, 1, 1], [], []>} : vector<8x64xbf16>, vector<64x64xbf16>, vector<8x64xf32> -> vector<8x64xf32>
    %c0_15 = arith.constant 0 : index
    %c0_16 = arith.constant 0 : index
    %20 = vector.load %arg7[%c0_15, %c0_16] : memref<1x64xf32, #tpu.memory_space<vmem>>, vector<1x64xf32>
    %21 = vector.broadcast %20 : vector<1x64xf32> to vector<8x64xf32>
    %22 = arith.addf %19, %21 : vector<8x64xf32>
    %cst_17 = arith.constant 0.000000e+00 : f32
    %23 = vector.broadcast %cst_17 : f32 to vector<8x64xf32>
    %24 = arith.maximumf %22, %23 : vector<8x64xf32>
    %25 = arith.truncf %24 : vector<8x64xf32> to vector<8x64xbf16>
    %c0_18 = arith.constant 0 : index
    %c0_19 = arith.constant 0 : index
    %26 = vector.load %arg8[%c0_18, %c0_19] : memref<64x16xbf16, #tpu.memory_space<vmem>>, vector<64x16xbf16>
    %cst_20 = arith.constant dense<0.000000e+00> : vector<8x16xf32>
    %27 = tpu.matmul %25, %26, %cst_20 {dimension_numbers = #tpu.dot_dimension_numbers<[1], [0], [0], [1], [0, 0, 1, 1], [], []>} : vector<8x64xbf16>, vector<64x16xbf16>, vector<8x16xf32> -> vector<8x16xf32>
    %c0_21 = arith.constant 0 : index
    %c0_22 = arith.constant 0 : index
    %28 = vector.load %arg9[%c0_21, %c0_22] : memref<1x16xf32, #tpu.memory_space<vmem>>, vector<1x16xf32>
    %29 = vector.broadcast %28 : vector<1x16xf32> to vector<8x16xf32>
    %30 = arith.addf %27, %29 : vector<8x16xf32>
    %c0_23 = arith.constant 0 : index
    %c0_24 = arith.constant 0 : index
    %31 = vector.load %arg10[%c0_23, %c0_24] : memref<8x16xf32, #tpu.memory_space<vmem>>, vector<8x16xf32>
    tpu.vector_store %arg10[%c0_23, %c0_24], %30 {strides = array<i32>} : memref<8x16xf32, #tpu.memory_space<vmem>>, vector<8x16xf32>,
    return
  }
  func.func @transform_0(%arg0: i32) -> (i32, i32) {
    %c0_i32 = arith.constant 0 : i32
    %c0_i32_0 = arith.constant 0 : i32
    return %arg0, %c0_i32 : i32, i32
  }
  func.func @transform_1(%arg0: i32) -> (i32, i32) {
    %c0_i32 = arith.constant 0 : i32
    %c0_i32_0 = arith.constant 0 : i32
    %c0_i32_1 = arith.constant 0 : i32
    return %c0_i32, %c0_i32_0 : i32, i32
  }
  func.func @transform_2(%arg0: i32) -> (i32, i32) {
    %c0_i32 = arith.constant 0 : i32
    %c0_i32_0 = arith.constant 0 : i32
    %c0_i32_1 = arith.constant 0 : i32
    return %c0_i32, %c0_i32_0 : i32, i32
  }
  func.func @transform_3(%arg0: i32) -> (i32, i32) {
    %c0_i32 = arith.constant 0 : i32
    %c0_i32_0 = arith.constant 0 : i32
    %c0_i32_1 = arith.constant 0 : i32
    return %c0_i32, %c0_i32_0 : i32, i32
  }
  func.func @transform_4(%arg0: i32) -> (i32, i32) {
    %c0_i32 = arith.constant 0 : i32
    %c0_i32_0 = arith.constant 0 : i32
    %c0_i32_1 = arith.constant 0 : i32
    return %c0_i32, %c0_i32_0 : i32, i32
  }
  func.func @transform_5(%arg0: i32) -> (i32, i32) {
    %c0_i32 = arith.constant 0 : i32
    %c0_i32_0 = arith.constant 0 : i32
    %c0_i32_1 = arith.constant 0 : i32
    return %c0_i32, %c0_i32_0 : i32, i32
  }
  func.func @transform_6(%arg0: i32) -> (i32, i32) {
    %c0_i32 = arith.constant 0 : i32
    %c0_i32_0 = arith.constant 0 : i32
    %c0_i32_1 = arith.constant 0 : i32
    return %c0_i32, %c0_i32_0 : i32, i32
  }
  func.func @transform_7(%arg0: i32) -> (i32, i32) {
    %c0_i32 = arith.constant 0 : i32
    %c0_i32_0 = arith.constant 0 : i32
    %c0_i32_1 = arith.constant 0 : i32
    return %c0_i32, %c0_i32_0 : i32, i32
  }
  func.func @transform_8(%arg0: i32) -> (i32, i32) {
    %c0_i32 = arith.constant 0 : i32
    %c0_i32_0 = arith.constant 0 : i32
    %c0_i32_1 = arith.constant 0 : i32
    return %c0_i32, %c0_i32_0 : i32, i32
  }
  func.func @transform_9(%arg0: i32) -> (i32, i32) {
    %c0_i32 = arith.constant 0 : i32
    %c0_i32_0 = arith.constant 0 : i32
    return %arg0, %c0_i32 : i32, i32
  }
}

</mosaic_0001>

<llo_original>
// kernel: decoder_forward.1
$region0: #{decoder_forward.1}
  #allocation0 [shape = 'u32[]', space=smem, size = 0x4, offset = 0x4, fixed_abs, tag = 'smem constant byte address 0x4 - core index']
  #allocation1 [shape = 'u32[144,128]{1,0:T(1,128)}', space=vmem, size = 0x12000, scoped, tag = 'internal scratch']
  %s0 = inlined_call_operand.vmem [shape: f32[8,32], index: 0, kind: input, shape index: {}]
  %s1 = inlined_call_operand.hbm [shape: bf16[32,64], index: 1, kind: input, shape index: {}]
  %s2 = inlined_call_operand.vmem [shape: f32[1,64], index: 2, kind: input, shape index: {}]
  %s3 = inlined_call_operand.vmem [shape: bf16[64,64], index: 3, kind: input, shape index: {}]
  %s4 = inlined_call_operand.vmem [shape: f32[1,64], index: 4, kind: input, shape index: {}]
  %s5 = inlined_call_operand.hbm [shape: bf16[64,64], index: 5, kind: input, shape index: {}]
  %s6 = inlined_call_operand.vmem [shape: f32[1,64], index: 6, kind: input, shape index: {}]
  %s7 = inlined_call_operand.vmem [shape: bf16[64,16], index: 7, kind: input, shape index: {}]
  %s8 = inlined_call_operand.vmem [shape: f32[1,16], index: 8, kind: input, shape index: {}]
  %s9 = inlined_call_operand.hbm [shape: f32[8,16], index: 9, kind: output, shape index: {}]
  %s10 = sld [smem:[#allocation0]]
  $region54: #{decoder_forward.1} parent=0
    _
  %s12 = ssub.s32 1, %s10
  %s13 = scalar_select 0, %s12, %s10
  $region1: #{decoder_forward.1} parent=0
    #allocation2 [shape = 'u8[8192]{0}', space=vmem, size = 0x2000, scoped, tag = 'input window, operand 1, single buffered']
    #allocation3 [shape = 's32[1]{0}', space=sflag, size = 0x4, scoped, tag = 'scoped memory for decoder_forward.1']
    #allocation4 [shape = 's32[1]{0}', space=sflag, size = 0x4, scoped, tag = 'scoped memory for decoder_forward.1']
    #allocation5 [shape = 'u8[16384]{0}', space=vmem, size = 0x4000, scoped, tag = 'input window, operand 5, single buffered']
    #allocation6 [shape = 's32[1]{0}', space=sflag, size = 0x4, scoped, tag = 'scoped memory for decoder_forward.1']
    #allocation7 [shape = 'u8[4096]{0}', space=vmem, size = 0x1000, scoped, tag = 'output window, operand 0, single buffered']
    %14 = vsyncpa [#allocation3], 0
    %15 = vsyncpa [#allocation6], 0
    %16 = vsyncpa [#allocation4], 0
    // Predicated region
    $region2: #{decoder_forward.1} parent=1 // pred_check
      _
    $region3: #{decoder_forward.1} parent=1 // pred_check_branch
      %18 = sbr.rel (0) target = $region5
    $region4: #{decoder_forward.1} parent=1 // pred_region
      _
    $region5: #{decoder_forward.1} parent=1 // pred_fallthru
      _
    // Predicated region
    $region6: #{decoder_forward.1} parent=1 // pred_check
      _
    $region7: #{decoder_forward.1} parent=1 // pred_check_branch
      %20 = sbr.rel (0) target = $region9
    $region8: #{decoder_forward.1} parent=1 // pred_region
      %s22 = ssub.s32 256, 256
      %23 = vsyncadd [#allocation3], %s22
      %s24 = sshll.u32 [#allocation2], 4
      %s25 = int_to_ptr.vmem [resolvable:$true] %s24
      %30 = dma.hbm_to_vmem [thread:$0]  %s1, 256, %s25, [#allocation3], 64, 64, 4
    $region9: #{decoder_forward.1} parent=1 // pred_fallthru
      _
    // Predicated region
    $region10: #{decoder_forward.1} parent=1 // pred_check
      _
    $region11: #{decoder_forward.1} parent=1 // pred_check_branch
      %32 = sbr.rel (0) target = $region13
    $region12: #{decoder_forward.1} parent=1 // pred_region
      _
    $region13: #{decoder_forward.1} parent=1 // pred_fallthru
      _
    // Predicated region
    $region14: #{decoder_forward.1} parent=1 // pred_check
      _
    $region15: #{decoder_forward.1} parent=1 // pred_check_branch
      %34 = sbr.rel (0) target = $region17
    $region16: #{decoder_forward.1} parent=1 // pred_region
      _
    $region17: #{decoder_forward.1} parent=1 // pred_fallthru
      _
    // Predicated region
    $region18: #{decoder_forward.1} parent=1 // pred_check
      _
    $region19: #{decoder_forward.1} parent=1 // pred_check_branch
      %36 = sbr.rel (0) target = $region21
    $region20: #{decoder_forward.1} parent=1 // pred_region
      _
    $region21: #{decoder_forward.1} parent=1 // pred_fallthru
      _
    // Predicated region
    $region22: #{decoder_forward.1} parent=1 // pred_check
      _
    $region23: #{decoder_forward.1} parent=1 // pred_check_branch
      %38 = sbr.rel (0) target = $region25
    $region24: #{decoder_forward.1} parent=1 // pred_region
      %s40 = ssub.s32 512, 512
      %41 = vsyncadd [#allocation6], %s40
      %s42 = sshll.u32 [#allocation5], 4
      %s43 = int_to_ptr.vmem [resolvable:$true] %s42
      %48 = dma.hbm_to_vmem [thread:$0]  %s5, 512, %s43, [#allocation6], 64, 64, 4
    $region25: #{decoder_forward.1} parent=1 // pred_fallthru
      _
    // Predicated region
    $region26: #{decoder_forward.1} parent=1 // pred_check
      _
    $region27: #{decoder_forward.1} parent=1 // pred_check_branch
      %50 = sbr.rel (0) target = $region29
    $region28: #{decoder_forward.1} parent=1 // pred_region
      _
    $region29: #{decoder_forward.1} parent=1 // pred_fallthru
      _
    // Predicated region
    $region30: #{decoder_forward.1} parent=1 // pred_check
      _
    $region31: #{decoder_forward.1} parent=1 // pred_check_branch
      %52 = sbr.rel (0) target = $region33
    $region32: #{decoder_forward.1} parent=1 // pred_region
      _
    $region33: #{decoder_forward.1} parent=1 // pred_fallthru
      _
    // Predicated region
    $region34: #{decoder_forward.1} parent=1 // pred_check
      _
    $region35: #{decoder_forward.1} parent=1 // pred_check_branch
      %54 = sbr.rel (0) target = $region37
    $region36: #{decoder_forward.1} parent=1 // pred_region
      _
    $region37: #{decoder_forward.1} parent=1 // pred_fallthru
      _
    // Predicated region
    $region38: #{decoder_forward.1} parent=1 // pred_check
      _
    $region39: #{decoder_forward.1} parent=1 // pred_check_branch
      %56 = sbr.rel (0) target = $region41
    $region40: #{decoder_forward.1} parent=1 // pred_region
      %57 = dma.done [#allocation3], 256
    $region41: #{decoder_forward.1} parent=1 // pred_fallthru
      _
    // Predicated region
    $region42: #{decoder_forward.1} parent=1 // pred_check
      _
    $region43: #{decoder_forward.1} parent=1 // pred_check_branch
      %59 = sbr.rel (0) target = $region45
    $region44: #{decoder_forward.1} parent=1 // pred_region
      %60 = dma.done [#allocation6], 512
    $region45: #{decoder_forward.1} parent=1 // pred_fallthru
      _
    %v62 = vld [vmem:[%s0] sm:$0xff]
    %v63 = vpack.c.bf16 %v62, %v62
    %v64 = vld [vmem:[#allocation2] sm:$0xf]
    %v65 = vld [vmem:[#allocation2 + $0x4] sm:$0xf]
    %v66 = vld [vmem:[#allocation2 + $0x8] sm:$0xf]
    %v67 = vld [vmem:[#allocation2 + $0xc] sm:$0xf]
    %v68 = vld [vmem:[%s2] sm:$0x1]
    %v70 = vlaneseq
    %v71 = vshrl.u32 %v70, 7
    %v72 = vsub.s32 0, %v71
    %v73 = vrot.slane %v68, %v72
    %v79 = vunpack.c.l.b16 %v64
    %v80 = vunpack.c.l.b16 %v65
    %v81 = vunpack.c.l.b16 %v66
    %v82 = vunpack.c.l.b16 %v67
    %v83 = vpack.c.b16 %v80, %v79
    %v84 = vpack.c.b16 %v82, %v81
    %vm87 = vcmask 261120
    %v89 = vsel %vm87, %v63, 0
    %91 = vmatprep.subr.bf16.mxu0 0
    %92 = vmatpush1.bf16.msra.mxu0 0
    %93 = vmatprep.subr.bf16.mxu0 0
    %94 = vmatpush1.bf16.msra.mxu0 0
    %95 = vmatprep.subr.bf16.mxu0 0
    %96 = vmatpush1.bf16.msra.mxu0 0
    %97 = vmatprep.subr.bf16.mxu0 0
    %98 = vmatpush1.bf16.msra.mxu0 0
    %99 = vmatprep.subr.bf16.mxu0 0
    %100 = vmatpush1.bf16.msra.mxu0 0
    %101 = vmatprep.subr.bf16.mxu0 0
    %102 = vmatpush1.bf16.msra.mxu0 0
    %103 = vmatprep.subr.bf16.mxu0 0
    %104 = vmatpush1.bf16.msra.mxu0 %v84
    %105 = vmatprep.subr.bf16.mxu0 0
    %106 = vmatpush1.bf16.msra.mxu0 %v83
    %107 = vmatprep.subr.bf16.mxu0 0
    %108 = vmatpush2.bf16.msra.mxu0 0
    %109 = vmatprep.subr.bf16.mxu0 0
    %110 = vmatpush2.bf16.msra.mxu0 0
    %111 = vmatprep.subr.bf16.mxu0 0
    %112 = vmatpush2.bf16.msra.mxu0 0
    %113 = vmatprep.subr.bf16.mxu0 0
    %114 = vmatpush2.bf16.msra.mxu0 0
    %115 = vmatprep.subr.bf16.mxu0 0
    %116 = vmatpush2.bf16.msra.mxu0 0
    %117 = vmatprep.subr.bf16.mxu0 0
    %118 = vmatpush2.bf16.msra.mxu0 0
    %119 = vmatprep.subr.bf16.mxu0 0
    %120 = vmatpush2.bf16.msra.mxu0 0
    %121 = vmatprep.subr.bf16.mxu0 0
    %122 = vmatpush2.bf16.msra.mxu0 0
    %123 = vmatprep.mubr.bf16.mxu0 0
    %124 = vmatmul.mubr.bf16.gmra.mxu0 %v89
    %v125 = vpop.f32.mrf.mxu0
    %v126 = vadd.f32 %v73, %v125
    %v127 = vpop.f32.mrf.mxu0
    %v128 = vpop.f32.mrf.mxu0
    %v129 = vpop.f32.mrf.mxu0
    %130 = vdwg.mxu0
    %v131 = vmax.f32 %v126, 0.0
    %v132 = vpack.c.bf16 %v131, %v131
    %v133 = vld [vmem:[%s3] sm:$0xf]
    %v134 = vld [vmem:[%s3 + $0x4] sm:$0xf]
    %v135 = vld [vmem:[%s3 + $0x8] sm:$0xf]
    %v136 = vld [vmem:[%s3 + $0xc] sm:$0xf]
    %v137 = vld [vmem:[%s3 + $0x10] sm:$0xf]
    %v138 = vld [vmem:[%s3 + $0x14] sm:$0xf]
    %v139 = vld [vmem:[%s3 + $0x18] sm:$0xf]
    %v140 = vld [vmem:[%s3 + $0x1c] sm:$0xf]
    %v141 = vld [vmem:[%s4] sm:$0x1]
    %v143 = vlaneseq
    %v144 = vshrl.u32 %v143, 7
    %v145 = vsub.s32 0, %v144
    %v146 = vrot.slane %v141, %v145
    %v156 = vunpack.c.l.b16 %v133
    %v157 = vunpack.c.l.b16 %v134
    %v158 = vunpack.c.l.b16 %v135
    %v159 = vunpack.c.l.b16 %v136
    %v160 = vunpack.c.l.b16 %v137
    %v161 = vunpack.c.l.b16 %v138
    %v162 = vunpack.c.l.b16 %v139
    %v163 = vunpack.c.l.b16 %v140
    %v164 = vpack.c.b16 %v157, %v156
    %v165 = vpack.c.b16 %v159, %v158
    %v166 = vpack.c.b16 %v161, %v160
    %v167 = vpack.c.b16 %v163, %v162
    %vm172 = vcmask 523264
    %v174 = vsel %vm172, %v132, 0
    %176 = vmatprep.subr.bf16.mxu0 0
    %177 = vmatpush1.bf16.msra.mxu0 0
    %178 = vmatprep.subr.bf16.mxu0 0
    %179 = vmatpush1.bf16.msra.mxu0 0
    %180 = vmatprep.subr.bf16.mxu0 0
    %181 = vmatpush1.bf16.msra.mxu0 0
    %182 = vmatprep.subr.bf16.mxu0 0
    %183 = vmatpush1.bf16.msra.mxu0 0
    %184 = vmatprep.subr.bf16.mxu0 0
    %185 = vmatpush1.bf16.msra.mxu0 %v167
    %186 = vmatprep.subr.bf16.mxu0 0
    %187 = vmatpush1.bf16.msra.mxu0 %v166
    %188 = vmatprep.subr.bf16.mxu0 0
    %189 = vmatpush1.bf16.msra.mxu0 %v165
    %190 = vmatprep.subr.bf16.mxu0 0
    %191 = vmatpush1.bf16.msra.mxu0 %v164
    %192 = vmatprep.subr.bf16.mxu0 0
    %193 = vmatpush2.bf16.msra.mxu0 0
    %194 = vmatprep.subr.bf16.mxu0 0
    %195 = vmatpush2.bf16.msra.mxu0 0
    %196 = vmatprep.subr.bf16.mxu0 0
    %197 = vmatpush2.bf16.msra.mxu0 0
    %198 = vmatprep.subr.bf16.mxu0 0
    %199 = vmatpush2.bf16.msra.mxu0 0
    %200 = vmatprep.subr.bf16.mxu0 0
    %201 = vmatpush2.bf16.msra.mxu0 0
    %202 = vmatprep.subr.bf16.mxu0 0
    %203 = vmatpush2.bf16.msra.mxu0 0
    %204 = vmatprep.subr.bf16.mxu0 0
    %205 = vmatpush2.bf16.msra.mxu0 0
    %206 = vmatprep.subr.bf16.mxu0 0
    %207 = vmatpush2.bf16.msra.mxu0 0
    %208 = vmatprep.mubr.bf16.mxu0 0
    %209 = vmatmul.mubr.bf16.gmra.mxu0 %v174
    %v210 = vpop.f32.mrf.mxu0
    %v211 = vadd.f32 %v146, %v210
    %v212 = vpop.f32.mrf.mxu0
    %v213 = vpop.f32.mrf.mxu0
    %v214 = vpop.f32.mrf.mxu0
    %215 = vdwg.mxu0
    %v216 = vmax.f32 %v211, 0.0
    %v217 = vpack.c.bf16 %v216, %v216
    %v218 = vld [vmem:[#allocation5] sm:$0xf]
    %v219 = vld [vmem:[#allocation5 + $0x4] sm:$0xf]
    %v220 = vld [vmem:[#allocation5 + $0x8] sm:$0xf]
    %v221 = vld [vmem:[#allocation5 + $0xc] sm:$0xf]
    %v222 = vld [vmem:[#allocation5 + $0x10] sm:$0xf]
    %v223 = vld [vmem:[#allocation5 + $0x14] sm:$0xf]
    %v224 = vld [vmem:[#allocation5 + $0x18] sm:$0xf]
    %v225 = vld [vmem:[#allocation5 + $0x1c] sm:$0xf]
    %v226 = vld [vmem:[%s6] sm:$0x1]
    %v228 = vlaneseq
    %v229 = vshrl.u32 %v228, 7
    %v230 = vsub.s32 0, %v229
    %v231 = vrot.slane %v226, %v230
    %v241 = vunpack.c.l.b16 %v218
    %v242 = vunpack.c.l.b16 %v219
    %v243 = vunpack.c.l.b16 %v220
    %v244 = vunpack.c.l.b16 %v221
    %v245 = vunpack.c.l.b16 %v222
    %v246 = vunpack.c.l.b16 %v223
    %v247 = vunpack.c.l.b16 %v224
    %v248 = vunpack.c.l.b16 %v225
    %v249 = vpack.c.b16 %v242, %v241
    %v250 = vpack.c.b16 %v244, %v243
    %v251 = vpack.c.b16 %v246, %v245
    %v252 = vpack.c.b16 %v248, %v247
    %v258 = vsel %vm172, %v217, 0
    %260 = vmatprep.subr.bf16.mxu0 0
    %261 = vmatpush1.bf16.msra.mxu0 0
    %262 = vmatprep.subr.bf16.mxu0 0
    %263 = vmatpush1.bf16.msra.mxu0 0
    %264 = vmatprep.subr.bf16.mxu0 0
    %265 = vmatpush1.bf16.msra.mxu0 0
    %266 = vmatprep.subr.bf16.mxu0 0
    %267 = vmatpush1.bf16.msra.mxu0 0
    %268 = vmatprep.subr.bf16.mxu0 0
    %269 = vmatpush1.bf16.msra.mxu0 %v252
    %270 = vmatprep.subr.bf16.mxu0 0
    %271 = vmatpush1.bf16.msra.mxu0 %v251
    %272 = vmatprep.subr.bf16.mxu0 0
    %273 = vmatpush1.bf16.msra.mxu0 %v250
    %274 = vmatprep.subr.bf16.mxu0 0
    %275 = vmatpush1.bf16.msra.mxu0 %v249
    %276 = vmatprep.subr.bf16.mxu0 0
    %277 = vmatpush2.bf16.msra.mxu0 0
    %278 = vmatprep.subr.bf16.mxu0 0
    %279 = vmatpush2.bf16.msra.mxu0 0
    %280 = vmatprep.subr.bf16.mxu0 0
    %281 = vmatpush2.bf16.msra.mxu0 0
    %282 = vmatprep.subr.bf16.mxu0 0
    %283 = vmatpush2.bf16.msra.mxu0 0
    %284 = vmatprep.subr.bf16.mxu0 0
    %285 = vmatpush2.bf16.msra.mxu0 0
    %286 = vmatprep.subr.bf16.mxu0 0
    %287 = vmatpush2.bf16.msra.mxu0 0
    %288 = vmatprep.subr.bf16.mxu0 0
    %289 = vmatpush2.bf16.msra.mxu0 0
    %290 = vmatprep.subr.bf16.mxu0 0
    %291 = vmatpush2.bf16.msra.mxu0 0
    %292 = vmatprep.mubr.bf16.mxu0 0
    %293 = vmatmul.mubr.bf16.gmra.mxu0 %v258
    %v294 = vpop.f32.mrf.mxu0
    %v295 = vadd.f32 %v231, %v294
    %v296 = vpop.f32.mrf.mxu0
    %v297 = vpop.f32.mrf.mxu0
    %v298 = vpop.f32.mrf.mxu0
    %299 = vdwg.mxu0
    %v300 = vmax.f32 %v295, 0.0
    %v301 = vpack.c.bf16 %v300, %v300
    %v302 = vld [vmem:[%s7] sm:$0xf]
    %v303 = vld [vmem:[%s7 + $0x4] sm:$0xf]
    %v304 = vld [vmem:[%s7 + $0x8] sm:$0xf]
    %v305 = vld [vmem:[%s7 + $0xc] sm:$0xf]
    %v306 = vld [vmem:[%s7 + $0x10] sm:$0xf]
    %v307 = vld [vmem:[%s7 + $0x14] sm:$0xf]
    %v308 = vld [vmem:[%s7 + $0x18] sm:$0xf]
    %v309 = vld [vmem:[%s7 + $0x1c] sm:$0xf]
    %v310 = vld [vmem:[%s8] sm:$0x1]
    %v312 = vlaneseq
    %v313 = vshrl.u32 %v312, 7
    %v314 = vsub.s32 0, %v313
    %v315 = vrot.slane %v310, %v314
    %v325 = vunpack.c.l.b16 %v302
    %v326 = vunpack.c.l.b16 %v303
    %v327 = vunpack.c.l.b16 %v304
    %v328 = vunpack.c.l.b16 %v305
    %v329 = vunpack.c.l.b16 %v306
    %v330 = vunpack.c.l.b16 %v307
    %v331 = vunpack.c.l.b16 %v308
    %v332 = vunpack.c.l.b16 %v309
    %v333 = vpack.c.b16 %v326, %v325
    %v334 = vpack.c.b16 %v328, %v327
    %v335 = vpack.c.b16 %v330, %v329
    %v336 = vpack.c.b16 %v332, %v331
    %v342 = vsel %vm172, %v301, 0
    %344 = vmatprep.subr.bf16.mxu0 0
    %345 = vmatpush1.bf16.msra.mxu0 0
    %346 = vmatprep.subr.bf16.mxu0 0
    %347 = vmatpush1.bf16.msra.mxu0 0
    %348 = vmatprep.subr.bf16.mxu0 0
    %349 = vmatpush1.bf16.msra.mxu0 0
    %350 = vmatprep.subr.bf16.mxu0 0
    %351 = vmatpush1.bf16.msra.mxu0 0
    %352 = vmatprep.subr.bf16.mxu0 0
    %353 = vmatpush1.bf16.msra.mxu0 %v336
    %354 = vmatprep.subr.bf16.mxu0 0
    %355 = vmatpush1.bf16.msra.mxu0 %v335
    %356 = vmatprep.subr.bf16.mxu0 0
    %357 = vmatpush1.bf16.msra.mxu0 %v334
    %358 = vmatprep.subr.bf16.mxu0 0
    %359 = vmatpush1.bf16.msra.mxu0 %v333
    %360 = vmatprep.subr.bf16.mxu0 0
    %361 = vmatpush2.bf16.msra.mxu0 0
    %362 = vmatprep.subr.bf16.mxu0 0
    %363 = vmatpush2.bf16.msra.mxu0 0
    %364 = vmatprep.subr.bf16.mxu0 0
    %365 = vmatpush2.bf16.msra.mxu0 0
    %366 = vmatprep.subr.bf16.mxu0 0
    %367 = vmatpush2.bf16.msra.mxu0 0
    %368 = vmatprep.subr.bf16.mxu0 0
    %369 = vmatpush2.bf16.msra.mxu0 0
    %370 = vmatprep.subr.bf16.mxu0 0
    %371 = vmatpush2.bf16.msra.mxu0 0
    %372 = vmatprep.subr.bf16.mxu0 0
    %373 = vmatpush2.bf16.msra.mxu0 0
    %374 = vmatprep.subr.bf16.mxu0 0
    %375 = vmatpush2.bf16.msra.mxu0 0
    %376 = vmatprep.mubr.bf16.mxu0 0
    %377 = vmatmul.mubr.bf16.gmra.mxu0 %v342
    %v378 = vpop.f32.mrf.mxu0
    %v379 = vadd.f32 %v315, %v378
    %v380 = vpop.f32.mrf.mxu0
    %v381 = vpop.f32.mrf.mxu0
    %v382 = vpop.f32.mrf.mxu0
    %383 = vdwg.mxu0
    %vm384 = vcmask 130048
    %385 = vst.msk [vmem:[#allocation7] sm:$0xff] %vm384, %v379
    // Predicated region
    $region46: #{decoder_forward.1} parent=1 // pred_check
      _
    $region47: #{decoder_forward.1} parent=1 // pred_check_branch
      %387 = sbr.rel (0) target = $region49
    $region48: #{decoder_forward.1} parent=1 // pred_region
      %s389 = ssub.s32 128, 128
      %390 = vsyncadd [#allocation4], %s389
      %s392 = sshll.u32 [#allocation7], 4
      %s393 = int_to_ptr.vmem [resolvable:$true] %s392
      %395 = dma.vmem_to_hbm [thread:$0]  %s393, 128, %s9, [#allocation4]
    $region49: #{decoder_forward.1} parent=1 // pred_fallthru
      _
    // Predicated region
    $region50: #{decoder_forward.1} parent=1 // pred_check
      _
    $region51: #{decoder_forward.1} parent=1 // pred_check_branch
      %397 = sbr.rel (0) target = $region53
    $region52: #{decoder_forward.1} parent=1 // pred_region
      %398 = dma.done [#allocation4], 128
    $region53: #{decoder_forward.1} parent=1 // pred_fallthru
      _
    %399 = vsyncpa [#allocation3], 1
    %400 = vsyncpa [#allocation6], 1
    %401 = vsyncpa [#allocation4], 1

</llo_original>
